<compile_context>
chip_gen: v6e
topology: v6e:2x2x1
jax: 0.10.0
libtpu: 0.0.40
codegen_flags: <defaults>
</compile_context>

<pallas_src>
import jax
import jax.numpy as jnp
from jax.experimental import pallas as pl
from jax.experimental.pallas import tpu as pltpu


def _mish_kernel(x_ref, o_ref):
    x = x_ref[...].astype(jnp.float32)
    # mish(x) = x * tanh(softplus(x)).  With t = exp(x):
    #   tanh(log1p(t)) = ((1+t)^2 - 1) / ((1+t)^2 + 1) = t*(t+2) / (t*(t+2) + 2)
    # Algebraically exact; needs only one transcendental (exp) plus a divide.
    # The min(x, 20) clamp keeps exp finite and reproduces torch's softplus
    # threshold semantics: for x > 20 the ratio rounds to 1.0 in f32, exactly
    # matching x * tanh(x) there (tanh(x>20) == 1.0f).
    t = jnp.exp(jnp.minimum(x, 20.0))
    u = t * (t + 2.0)
    y = x * (u / (u + 2.0))
    o_ref[...] = y.astype(o_ref.dtype)


def mish(x: jax.Array) -> jax.Array:
    orig_shape = x.shape
    dtype = x.dtype
    n = x.size
    itemsize = jnp.dtype(dtype).itemsize

    # Lane-dense last dim with zero padding in the common NCHW case.
    lanes = None
    for cand in (1024, 512, 256, 128):
        if n % cand == 0:
            lanes = cand
            break

    x_flat = jnp.ravel(x)            # free reshape of a contiguous buffer
    padded = False
    if lanes is None:
        # Rare fallback: pad minimally to a multiple of 128 lanes.
        lanes = 128
        n_pad = pl.cdiv(n, lanes) * lanes
        x_flat = jnp.pad(x_flat, (0, n_pad - n))
        padded = True

    rows = x_flat.size // lanes
    x2d = x_flat.reshape(rows, lanes)

    # ~2 MiB tiles: in+out x double-buffer = ~8 MiB of pipelined VMEM,
    # safe on v5e (16 MiB scoped default), v6e and v7x (64 MiB physical).
    target_tile_bytes = 2 * 1024 * 1024
    block_rows = max(8, target_tile_bytes // (lanes * itemsize))
    if block_rows >= rows:
        block_rows = rows                      # one block covers everything
    else:
        block_rows = (block_rows // 8) * 8     # keep sublane-aligned

    grid = (pl.cdiv(rows, block_rows),)        # partial last block is masked

    out2d = pl.pallas_call(
        _mish_kernel,
        out_shape=jax.ShapeDtypeStruct((rows, lanes), dtype),
        grid_spec=pltpu.PrefetchScalarGridSpec(
            num_scalar_prefetch=0,
            grid=grid,
            in_specs=[pl.BlockSpec((block_rows, lanes), lambda i: (i, 0))],
            out_specs=pl.BlockSpec((block_rows, lanes), lambda i: (i, 0)),
        ),
        compiler_params=pltpu.CompilerParams(
            dimension_semantics=("parallel",),
        ),
    )(x2d)

    out_flat = out2d.reshape(-1)
    if padded:
        out_flat = out_flat[:n]
    return out_flat.reshape(orig_shape)


if __name__ == "__main__":
    key = jax.random.PRNGKey(0)
    # NCHW, small shapes consistent with a conv-net activation input.
    x = jax.random.normal(key, (2, 4, 16, 16), dtype=jnp.float32) * 3.0

    y = mish(x)
    jax.block_until_ready(y)

    # Reference: pure-JAX mish with torch-matching softplus (threshold=20).
    sp_ref = jnp.where(x > 20.0, x, jnp.log1p(jnp.exp(jnp.minimum(x, 20.0))))
    y_ref = x * jnp.tanh(sp_ref)

    assert y.shape == x.shape and y.dtype == x.dtype
    assert jnp.allclose(y, y_ref, atol=1e-6, rtol=1e-5), float(
        jnp.max(jnp.abs(y - y_ref))
    )
    print("KERNEL_OK")
</pallas_src>

<mosaic_0001>
module attributes {stable_mosaic.version = 11 : i64} {
  func.func @_mish_kernel(%arg0: i32, %arg1: memref<2x1024xf32, #tpu.memory_space<vmem>>, %arg2: memref<2x1024xf32, #tpu.memory_space<vmem>>) attributes {dimension_semantics = [#tpu.dimension_semantics<parallel>], iteration_bounds = array<i64: 1>, scalar_prefetch = 0 : i64, scratch_operands = 0 : i64, tpu.core_type = #tpu.core_type<tc>, window_params = [{transform_indices = @transform_0, window_bounds = array<i64: 2, 1024>}, {transform_indices = @transform_1, window_bounds = array<i64: 2, 1024>}]} {
    %c0 = arith.constant 0 : index
    %c0_0 = arith.constant 0 : index
    %0 = vector.load %arg1[%c0, %c0_0] : memref<2x1024xf32, #tpu.memory_space<vmem>>, vector<2x1024xf32>
    %cst = arith.constant 2.000000e+01 : f32
    %1 = vector.broadcast %cst : f32 to vector<2x1024xf32>
    %2 = arith.minimumf %0, %1 : vector<2x1024xf32>
    %3 = math.exp %2 : vector<2x1024xf32>
    %cst_1 = arith.constant 2.000000e+00 : f32
    %4 = vector.broadcast %cst_1 : f32 to vector<2x1024xf32>
    %5 = arith.addf %3, %4 : vector<2x1024xf32>
    %6 = arith.mulf %3, %5 : vector<2x1024xf32>
    %cst_2 = arith.constant 2.000000e+00 : f32
    %7 = vector.broadcast %cst_2 : f32 to vector<2x1024xf32>
    %8 = arith.addf %6, %7 : vector<2x1024xf32>
    %9 = arith.divf %6, %8 : vector<2x1024xf32>
    %10 = arith.mulf %0, %9 : vector<2x1024xf32>
    %c0_3 = arith.constant 0 : index
    %c0_4 = arith.constant 0 : index
    %11 = vector.load %arg2[%c0_3, %c0_4] : memref<2x1024xf32, #tpu.memory_space<vmem>>, vector<2x1024xf32>
    tpu.vector_store %arg2[%c0_3, %c0_4], %10 {strides = array<i32>} : memref<2x1024xf32, #tpu.memory_space<vmem>>, vector<2x1024xf32>,
    return
  }
  func.func @transform_0(%arg0: i32) -> (i32, i32) {
    %c0_i32 = arith.constant 0 : i32
    %c0_i32_0 = arith.constant 0 : i32
    return %arg0, %c0_i32 : i32, i32
  }
  func.func @transform_1(%arg0: i32) -> (i32, i32) {
    %c0_i32 = arith.constant 0 : i32
    %c0_i32_0 = arith.constant 0 : i32
    return %arg0, %c0_i32 : i32, i32
  }
}

</mosaic_0001>

<llo_original>
// kernel: tpu_custom_call.1
$region0: #{tpu_custom_call.1}
  #allocation0 [shape = 'u32[]', space=smem, size = 0x4, offset = 0x4, fixed_abs, tag = 'smem constant byte address 0x4 - core index']
  #allocation1 [shape = 'u32[144,128]{1,0:T(1,128)}', space=vmem, size = 0x12000, scoped, tag = 'internal scratch']
  %s0 = inlined_call_operand.hbm [shape: f32[2,1024], index: 0, kind: input, shape index: {}]
  %s1 = inlined_call_operand.hbm [shape: f32[2,1024], index: 1, kind: output, shape index: {}]
  %s2 = sld [smem:[#allocation0]]
  $region18: #{tpu_custom_call.1} parent=0
    _
  %s4 = ssub.s32 1, %s2
  %s5 = scalar_select 0, %s4, %s2
  $region1: #{tpu_custom_call.1} parent=0
    #allocation2 [shape = 'u8[8192]{0}', space=vmem, size = 0x2000, scoped, tag = 'input window, operand 0, single buffered']
    #allocation3 [shape = 's32[1]{0}', space=sflag, size = 0x4, scoped, tag = 'scoped memory for tpu_custom_call.1']
    #allocation4 [shape = 's32[1]{0}', space=sflag, size = 0x4, scoped, tag = 'scoped memory for tpu_custom_call.1']
    #allocation5 [shape = 'u8[8192]{0}', space=vmem, size = 0x2000, scoped, tag = 'output window, operand 0, single buffered']
    %6 = vsyncpa [#allocation3], 0
    %7 = vsyncpa [#allocation4], 0
    // Predicated region
    $region2: #{tpu_custom_call.1} parent=1 // pred_check
      _
    $region3: #{tpu_custom_call.1} parent=1 // pred_check_branch
      %9 = sbr.rel (0) target = $region5
    $region4: #{tpu_custom_call.1} parent=1 // pred_region
      %s11 = ssub.s32 256, 256
      %12 = vsyncadd [#allocation3], %s11
      %s14 = sshll.u32 [#allocation2], 4
      %s15 = int_to_ptr.vmem [resolvable:$true] %s14
      %17 = dma.hbm_to_vmem [thread:$0]  %s0, 256, %s15, [#allocation3]
    $region5: #{tpu_custom_call.1} parent=1 // pred_fallthru
      _
    // Predicated region
    $region6: #{tpu_custom_call.1} parent=1 // pred_check
      _
    $region7: #{tpu_custom_call.1} parent=1 // pred_check_branch
      %19 = sbr.rel (0) target = $region9
    $region8: #{tpu_custom_call.1} parent=1 // pred_region
      %20 = dma.done [#allocation3], 256
    $region9: #{tpu_custom_call.1} parent=1 // pred_fallthru
      _
    %v21 = vld [vmem:[#allocation2] sm:$0xff]
    %v22 = vld [vmem:[#allocation2 + $0x8] sm:$0xff]
    %v23 = vmin.f32 %v21, 20.0
    %v24 = vmin.f32 %v22, 20.0
    %v25 = vmul.f32 %v23, 1.442695
    %v26 = vpow.pop %v25
    %v27 = vmul.f32 %v24, 1.442695
    %v28 = vpow.pop %v27
    %v29 = vadd.f32 %v26, 2.0
    %v30 = vadd.f32 %v28, 2.0
    %v31 = vmul.f32 %v26, %v29
    %v32 = vmul.f32 %v28, %v30
    %v33 = vadd.f32 %v31, 2.0
    %v34 = vadd.f32 %v32, 2.0
    %v35 = vrcp.pop %v33
    %v36 = vmul.f32 %v31, %v35
    %v37 = vrcp.pop %v34
    %v38 = vmul.f32 %v32, %v37
    %v39 = vmul.f32 %v21, %v36
    %v40 = vmul.f32 %v22, %v38
    %41 = vst [vmem:[#allocation5] sm:$0xff] %v39
    %42 = vst [vmem:[#allocation5 + $0x8] sm:$0xff] %v40
    // Predicated region
    $region10: #{tpu_custom_call.1} parent=1 // pred_check
      _
    $region11: #{tpu_custom_call.1} parent=1 // pred_check_branch
      %44 = sbr.rel (0) target = $region13
    $region12: #{tpu_custom_call.1} parent=1 // pred_region
      %s46 = ssub.s32 256, 256
      %47 = vsyncadd [#allocation4], %s46
      %s49 = sshll.u32 [#allocation5], 4
      %s50 = int_to_ptr.vmem [resolvable:$true] %s49
      %52 = dma.vmem_to_hbm [thread:$0]  %s50, 256, %s1, [#allocation4]
    $region13: #{tpu_custom_call.1} parent=1 // pred_fallthru
      _
    // Predicated region
    $region14: #{tpu_custom_call.1} parent=1 // pred_check
      _
    $region15: #{tpu_custom_call.1} parent=1 // pred_check_branch
      %54 = sbr.rel (0) target = $region17
    $region16: #{tpu_custom_call.1} parent=1 // pred_region
      %55 = dma.done [#allocation4], 256
    $region17: #{tpu_custom_call.1} parent=1 // pred_fallthru
      _
    %56 = vsyncpa [#allocation3], 1
    %57 = vsyncpa [#allocation4], 1

</llo_original>
